<compile_context>
chip_gen: v7x
topology: tpu7x:2x2x1
jax: 0.10.0
libtpu: 0.0.40
codegen_flags: <defaults>
</compile_context>

<pallas_src>
import numpy as np
import jax
import jax.numpy as jnp
from jax.experimental import pallas as pl
from jax.experimental.pallas import tpu as pltpu


def raw2xyz_kernel(x_ref, w_ref, o_ref):
    # x_ref / o_ref blocks: (1, C, S_TILE, 128) f32 in VMEM.
    # w_ref: (C*C,) f32 in SMEM (row-major C x C color matrix).
    c = x_ref.shape[1]
    for j in range(c):                         # statically unrolled: C is tiny
        # out[j] = sum_k w[j, k] * x[k]  -- scalar-splat FMAs on dense slabs.
        acc = w_ref[j * c] * x_ref[0, 0]
        for k in range(1, c):
            acc = acc + w_ref[j * c + k] * x_ref[0, k]
        o_ref[0, j] = acc.astype(o_ref.dtype)  # store channel j immediately


def raw2xyz_forward(x, weight, hw_tile=131072):
    """x: (N, C, H, W) float32 NCHW, weight: (C, C) float32 -> (N, C, H, W)."""
    n, c, h, w = x.shape
    hw = h * w

    # Flatten spatial and pad to a multiple of 128 so pixels pack densely into
    # (sublane, lane) = (S, 128) slabs.  The pad is removed after the kernel.
    xf = x.reshape(n, c, hw)
    pad = (-hw) % 128
    if pad:
        xf = jnp.pad(xf, ((0, 0), (0, 0), (0, pad)))
    hw_p = hw + pad
    s = hw_p // 128
    x4 = xf.reshape(n, c, s, 128)

    # Tile the sublane (pixel-row) axis.  Keep it a multiple of 8 (or full
    # extent) for clean (8,128) tiling; default ~131072 px/block is VMEM-safe
    # on v5e (16 MiB scoped) as well as v6e/v7x.
    s_tile = min(s, max(1, hw_tile // 128))
    if s >= 8:
        s_tile = max(8, (s_tile // 8) * 8)
    # v7x has 2 TensorCores: avoid a single-step grid when the frame is big
    # enough to split (no effect on the 1-TC v5e/v6e chips).
    if n * pl.cdiv(s, s_tile) < 2 and s >= 16:
        s_tile = max(8, (((s + 1) // 2) + 7) // 8 * 8)

    grid = (n, pl.cdiv(s, s_tile))
    w_flat = weight.reshape(-1).astype(x.dtype)

    out = pl.pallas_call(
        raw2xyz_kernel,
        out_shape=jax.ShapeDtypeStruct((n, c, s, 128), x.dtype),
        grid_spec=pltpu.PrefetchScalarGridSpec(
            num_scalar_prefetch=0,
            grid=grid,
            in_specs=[
                pl.BlockSpec((1, c, s_tile, 128), lambda b, t: (b, 0, t, 0)),
                pl.BlockSpec(memory_space=pltpu.MemorySpace.SMEM),
            ],
            out_specs=pl.BlockSpec((1, c, s_tile, 128),
                                   lambda b, t: (b, 0, t, 0)),
        ),
        compiler_params=pltpu.CompilerParams(
            dimension_semantics=("parallel", "parallel")),
    )(x4, w_flat)

    out = out.reshape(n, c, hw_p)
    if pad:
        out = out[:, :, :hw]
    return out.reshape(n, c, h, w)


def raw2xyz_reverse(x, weight):
    # reverse() reuses the same kernel with the inverse color matrix; the
    # matrix inverse itself is init-time host/XLA work, not a kernel op.
    return raw2xyz_forward(x, jnp.linalg.inv(weight))


def raw2xyz_reference(x, weight):
    """Pure-JAX reference mirroring the PyTorch forward."""
    return jnp.einsum('jk,nkhw->njhw', weight, x)


if __name__ == "__main__":
    key = jax.random.PRNGKey(0)
    x = jax.random.uniform(key, (2, 3, 16, 16), dtype=jnp.float32)
    # Deterministic camera-RGB -> XYZ(D50) color matrix (constructor `weight`).
    weight = jnp.asarray(np.array(
        [[0.4360747, 0.3850649, 0.1430804],
         [0.2225045, 0.7168786, 0.0606169],
         [0.0139322, 0.0971045, 0.7141733]], dtype=np.float32))

    out = raw2xyz_forward(x, weight)
    out = jax.block_until_ready(out)
    ref = raw2xyz_reference(x, weight)
    assert out.shape == x.shape and out.dtype == x.dtype
    np.testing.assert_allclose(np.asarray(out), np.asarray(ref),
                               rtol=1e-5, atol=1e-6)

    # Exercise the HW % 128 != 0 padding path as well.
    x2 = jax.random.uniform(jax.random.PRNGKey(1), (1, 3, 20, 20),
                            dtype=jnp.float32)
    out2 = jax.block_until_ready(raw2xyz_forward(x2, weight))
    np.testing.assert_allclose(np.asarray(out2),
                               np.asarray(raw2xyz_reference(x2, weight)),
                               rtol=1e-5, atol=1e-6)

    print("KERNEL_OK")
</pallas_src>

<mosaic_0001>
module attributes {stable_mosaic.version = 11 : i64} {
  func.func @raw2xyz_kernel(%arg0: i32, %arg1: i32, %arg2: memref<1x3x2x128xf32, #tpu.memory_space<vmem>>, %arg3: memref<9xf32, #tpu.memory_space<smem>>, %arg4: memref<1x3x2x128xf32, #tpu.memory_space<vmem>>) attributes {dimension_semantics = [#tpu.dimension_semantics<parallel>, #tpu.dimension_semantics<parallel>], iteration_bounds = array<i64: 2, 1>, scalar_prefetch = 0 : i64, scratch_operands = 0 : i64, tpu.core_type = #tpu.core_type<tc>, window_params = [{transform_indices = @transform_0, window_bounds = array<i64: 1, 3, 2, 128>}, {transform_indices = @transform_1, window_bounds = array<i64: 9>}, {transform_indices = @transform_2, window_bounds = array<i64: 1, 3, 2, 128>}]} {
    %c0 = arith.constant 0 : index
    %0 = memref.load %arg3[%c0] : memref<9xf32, #tpu.memory_space<smem>>
    %c0_0 = arith.constant 0 : index
    %c0_1 = arith.constant 0 : index
    %c0_2 = arith.constant 0 : index
    %c0_3 = arith.constant 0 : index
    %1 = vector.load %arg2[%c0_0, %c0_1, %c0_2, %c0_3] : memref<1x3x2x128xf32, #tpu.memory_space<vmem>>, vector<1x1x2x128xf32>
    %2 = vector.shape_cast %1 : vector<1x1x2x128xf32> to vector<2x128xf32>
    %3 = vector.broadcast %0 : f32 to vector<2x128xf32>
    %4 = arith.mulf %3, %2 : vector<2x128xf32>
    %c1 = arith.constant 1 : index
    %5 = memref.load %arg3[%c1] : memref<9xf32, #tpu.memory_space<smem>>
    %c0_4 = arith.constant 0 : index
    %c1_5 = arith.constant 1 : index
    %c0_6 = arith.constant 0 : index
    %c0_7 = arith.constant 0 : index
    %6 = vector.load %arg2[%c0_4, %c1_5, %c0_6, %c0_7] : memref<1x3x2x128xf32, #tpu.memory_space<vmem>>, vector<1x1x2x128xf32>
    %7 = vector.shape_cast %6 : vector<1x1x2x128xf32> to vector<2x128xf32>
    %8 = vector.broadcast %5 : f32 to vector<2x128xf32>
    %9 = arith.mulf %8, %7 : vector<2x128xf32>
    %10 = arith.addf %4, %9 : vector<2x128xf32>
    %c2 = arith.constant 2 : index
    %11 = memref.load %arg3[%c2] : memref<9xf32, #tpu.memory_space<smem>>
    %c0_8 = arith.constant 0 : index
    %c2_9 = arith.constant 2 : index
    %c0_10 = arith.constant 0 : index
    %c0_11 = arith.constant 0 : index
    %12 = vector.load %arg2[%c0_8, %c2_9, %c0_10, %c0_11] : memref<1x3x2x128xf32, #tpu.memory_space<vmem>>, vector<1x1x2x128xf32>
    %13 = vector.shape_cast %12 : vector<1x1x2x128xf32> to vector<2x128xf32>
    %14 = vector.broadcast %11 : f32 to vector<2x128xf32>
    %15 = arith.mulf %14, %13 : vector<2x128xf32>
    %16 = arith.addf %10, %15 : vector<2x128xf32>
    %c0_12 = arith.constant 0 : index
    %c0_13 = arith.constant 0 : index
    %c0_14 = arith.constant 0 : index
    %c0_15 = arith.constant 0 : index
    %17 = vector.load %arg4[%c0_12, %c0_13, %c0_14, %c0_15] : memref<1x3x2x128xf32, #tpu.memory_space<vmem>>, vector<1x1x2x128xf32>
    %18 = vector.shape_cast %17 : vector<1x1x2x128xf32> to vector<2x128xf32>
    %19 = vector.shape_cast %16 : vector<2x128xf32> to vector<1x1x2x128xf32>
    tpu.vector_store %arg4[%c0_12, %c0_13, %c0_14, %c0_15], %19 {strides = array<i32>} : memref<1x3x2x128xf32, #tpu.memory_space<vmem>>, vector<1x1x2x128xf32>,
    %c3 = arith.constant 3 : index
    %20 = memref.load %arg3[%c3] : memref<9xf32, #tpu.memory_space<smem>>
    %c0_16 = arith.constant 0 : index
    %c0_17 = arith.constant 0 : index
    %c0_18 = arith.constant 0 : index
    %c0_19 = arith.constant 0 : index
    %21 = vector.load %arg2[%c0_16, %c0_17, %c0_18, %c0_19] : memref<1x3x2x128xf32, #tpu.memory_space<vmem>>, vector<1x1x2x128xf32>
    %22 = vector.shape_cast %21 : vector<1x1x2x128xf32> to vector<2x128xf32>
    %23 = vector.broadcast %20 : f32 to vector<2x128xf32>
    %24 = arith.mulf %23, %22 : vector<2x128xf32>
    %c4 = arith.constant 4 : index
    %25 = memref.load %arg3[%c4] : memref<9xf32, #tpu.memory_space<smem>>
    %c0_20 = arith.constant 0 : index
    %c1_21 = arith.constant 1 : index
    %c0_22 = arith.constant 0 : index
    %c0_23 = arith.constant 0 : index
    %26 = vector.load %arg2[%c0_20, %c1_21, %c0_22, %c0_23] : memref<1x3x2x128xf32, #tpu.memory_space<vmem>>, vector<1x1x2x128xf32>
    %27 = vector.shape_cast %26 : vector<1x1x2x128xf32> to vector<2x128xf32>
    %28 = vector.broadcast %25 : f32 to vector<2x128xf32>
    %29 = arith.mulf %28, %27 : vector<2x128xf32>
    %30 = arith.addf %24, %29 : vector<2x128xf32>
    %c5 = arith.constant 5 : index
    %31 = memref.load %arg3[%c5] : memref<9xf32, #tpu.memory_space<smem>>
    %c0_24 = arith.constant 0 : index
    %c2_25 = arith.constant 2 : index
    %c0_26 = arith.constant 0 : index
    %c0_27 = arith.constant 0 : index
    %32 = vector.load %arg2[%c0_24, %c2_25, %c0_26, %c0_27] : memref<1x3x2x128xf32, #tpu.memory_space<vmem>>, vector<1x1x2x128xf32>
    %33 = vector.shape_cast %32 : vector<1x1x2x128xf32> to vector<2x128xf32>
    %34 = vector.broadcast %31 : f32 to vector<2x128xf32>
    %35 = arith.mulf %34, %33 : vector<2x128xf32>
    %36 = arith.addf %30, %35 : vector<2x128xf32>
    %c0_28 = arith.constant 0 : index
    %c1_29 = arith.constant 1 : index
    %c0_30 = arith.constant 0 : index
    %c0_31 = arith.constant 0 : index
    %37 = vector.load %arg4[%c0_28, %c1_29, %c0_30, %c0_31] : memref<1x3x2x128xf32, #tpu.memory_space<vmem>>, vector<1x1x2x128xf32>
    %38 = vector.shape_cast %37 : vector<1x1x2x128xf32> to vector<2x128xf32>
    %39 = vector.shape_cast %36 : vector<2x128xf32> to vector<1x1x2x128xf32>
    tpu.vector_store %arg4[%c0_28, %c1_29, %c0_30, %c0_31], %39 {strides = array<i32>} : memref<1x3x2x128xf32, #tpu.memory_space<vmem>>, vector<1x1x2x128xf32>,
    %c6 = arith.constant 6 : index
    %40 = memref.load %arg3[%c6] : memref<9xf32, #tpu.memory_space<smem>>
    %c0_32 = arith.constant 0 : index
    %c0_33 = arith.constant 0 : index
    %c0_34 = arith.constant 0 : index
    %c0_35 = arith.constant 0 : index
    %41 = vector.load %arg2[%c0_32, %c0_33, %c0_34, %c0_35] : memref<1x3x2x128xf32, #tpu.memory_space<vmem>>, vector<1x1x2x128xf32>
    %42 = vector.shape_cast %41 : vector<1x1x2x128xf32> to vector<2x128xf32>
    %43 = vector.broadcast %40 : f32 to vector<2x128xf32>
    %44 = arith.mulf %43, %42 : vector<2x128xf32>
    %c7 = arith.constant 7 : index
    %45 = memref.load %arg3[%c7] : memref<9xf32, #tpu.memory_space<smem>>
    %c0_36 = arith.constant 0 : index
    %c1_37 = arith.constant 1 : index
    %c0_38 = arith.constant 0 : index
    %c0_39 = arith.constant 0 : index
    %46 = vector.load %arg2[%c0_36, %c1_37, %c0_38, %c0_39] : memref<1x3x2x128xf32, #tpu.memory_space<vmem>>, vector<1x1x2x128xf32>
    %47 = vector.shape_cast %46 : vector<1x1x2x128xf32> to vector<2x128xf32>
    %48 = vector.broadcast %45 : f32 to vector<2x128xf32>
    %49 = arith.mulf %48, %47 : vector<2x128xf32>
    %50 = arith.addf %44, %49 : vector<2x128xf32>
    %c8 = arith.constant 8 : index
    %51 = memref.load %arg3[%c8] : memref<9xf32, #tpu.memory_space<smem>>
    %c0_40 = arith.constant 0 : index
    %c2_41 = arith.constant 2 : index
    %c0_42 = arith.constant 0 : index
    %c0_43 = arith.constant 0 : index
    %52 = vector.load %arg2[%c0_40, %c2_41, %c0_42, %c0_43] : memref<1x3x2x128xf32, #tpu.memory_space<vmem>>, vector<1x1x2x128xf32>
    %53 = vector.shape_cast %52 : vector<1x1x2x128xf32> to vector<2x128xf32>
    %54 = vector.broadcast %51 : f32 to vector<2x128xf32>
    %55 = arith.mulf %54, %53 : vector<2x128xf32>
    %56 = arith.addf %50, %55 : vector<2x128xf32>
    %c0_44 = arith.constant 0 : index
    %c2_45 = arith.constant 2 : index
    %c0_46 = arith.constant 0 : index
    %c0_47 = arith.constant 0 : index
    %57 = vector.load %arg4[%c0_44, %c2_45, %c0_46, %c0_47] : memref<1x3x2x128xf32, #tpu.memory_space<vmem>>, vector<1x1x2x128xf32>
    %58 = vector.shape_cast %57 : vector<1x1x2x128xf32> to vector<2x128xf32>
    %59 = vector.shape_cast %56 : vector<2x128xf32> to vector<1x1x2x128xf32>
    tpu.vector_store %arg4[%c0_44, %c2_45, %c0_46, %c0_47], %59 {strides = array<i32>} : memref<1x3x2x128xf32, #tpu.memory_space<vmem>>, vector<1x1x2x128xf32>,
    return
  }
  func.func @transform_0(%arg0: i32, %arg1: i32) -> (i32, i32, i32, i32) {
    %c0_i32 = arith.constant 0 : i32
    %c0_i32_0 = arith.constant 0 : i32
    %c0_i32_1 = arith.constant 0 : i32
    return %arg0, %c0_i32, %arg1, %c0_i32_0 : i32, i32, i32, i32
  }
  func.func @transform_1(%arg0: i32, %arg1: i32) -> i32 {
    %c0_i32 = arith.constant 0 : i32
    %c0_i32_0 = arith.constant 0 : i32
    return %c0_i32 : i32
  }
  func.func @transform_2(%arg0: i32, %arg1: i32) -> (i32, i32, i32, i32) {
    %c0_i32 = arith.constant 0 : i32
    %c0_i32_0 = arith.constant 0 : i32
    %c0_i32_1 = arith.constant 0 : i32
    return %arg0, %c0_i32, %arg1, %c0_i32_0 : i32, i32, i32, i32
  }
}

</mosaic_0001>

<llo_original>
// kernel: tpu_custom_call.1
$region0: #{tpu_custom_call.1}
  #allocation0 [shape = 'u32[]', space=smem, size = 0x4, offset = 0x4, fixed_abs, tag = 'smem constant byte address 0x4 - core index']
  #allocation1 [shape = 'u32[144,128]{1,0:T(1,128)}', space=vmem, size = 0x12000, scoped, tag = 'internal scratch']
  %s0 = inlined_call_operand.hbm [shape: f32[2,3,2,128], index: 0, kind: input, shape index: {}]
  %s1 = inlined_call_operand.vmem [shape: f32[9], index: 1, kind: input, shape index: {}]
  %s2 = inlined_call_operand.hbm [shape: f32[2,3,2,128], index: 2, kind: output, shape index: {}]
  %s3 = sld [smem:[#allocation0]]
  $region49: #{tpu_custom_call.1} parent=0
    _
  %s5 = ssub.s32 1, %s3
  %s6 = scalar_select 0, %s5, %s3
  $region1: #{tpu_custom_call.1} parent=0
    #allocation2 [shape = 'u8[6144]{0}', space=vmem, size = 0x1800, scoped, tag = 'input window, operand 0']
    #allocation3 [shape = 's32[2]{0}', space=sflag, size = 0x8, scoped, tag = 'scoped memory for tpu_custom_call.1']
    #allocation4 [shape = 's32[2]{0}', space=sflag, size = 0x8, scoped, tag = 'scoped memory for tpu_custom_call.1']
    #allocation5 [shape = 's32[2]{0}', space=sflag, size = 0x8, scoped, tag = 'scoped memory for tpu_custom_call.1']
    #allocation6 [shape = 'u8[512]{0}', space=smem, size = 0x200, scoped, tag = 'input window, operand 1, single buffered']
    #allocation7 [shape = 'u8[6144]{0}', space=vmem, size = 0x1800, scoped, tag = 'output window, operand 0']
    %7 = vsyncpa [#allocation3], 0
    %s8 = scalar_lea.sflag [#allocation3], 1
    %9 = vsyncpa %s8, 0
    %10 = vsyncpa [#allocation5], 0
    %11 = vsyncpa [#allocation4], 0
    %s12 = scalar_lea.sflag [#allocation4], 1
    %13 = vsyncpa %s12, 0
    loop: start=0, step=1, limit=4
    $region2: #{tpu_custom_call.1} parent=1 // loop_pre_header
      _
    $region3: #{tpu_custom_call.1} parent=1 // loop_header
      %s15 = sphi 0, %s19
      %p16 = scmp.ge.s32.totalorder %s15, 4
      %s22 = sphi 0, %s34
      %s23 = sphi 0, %s30
      %s24 = sphi 0, %s22
      %s25 = sphi 0, %s23
      %s26 = sphi 0, %s24
      %s27 = sphi 0, %s25
      %s39 = sphi 0, %s41
      %s42 = sphi 0, %s39
      %s43 = sphi 0, %s42
      %s59 = sphi 0, %s43
      %s63 = sphi 0, %s63
      %s65 = sphi 0, %s63
      %s66 = sphi 0, %s65
      %s80 = sphi 0, %s66
      %s88 = sphi 0, %s90
      %s91 = sphi 0, %s88
      %s92 = sphi 0, %s91
      %s108 = sphi 0, %s92
    $region4: #{tpu_custom_call.1} parent=1 // loop_header_branch
      %18 = sbr.rel (%p16) target = $region8
    $region5: #{tpu_custom_call.1} parent=1 // loop_body
      %s20 = ssub.s32 %s15, 1
      %s21 = ssub.s32 %s15, 2
      %s28 = sadd.s32 1, %s23
      %p29 = scmp.ge.s32.totalorder %s28, 1
      %s30 = scalar_select %p29, 0, %s28
      %s31 = sadd.s32 1, %s22
      %s32 = scalar_select %p29, %s31, %s22
      %p33 = scmp.ge.s32.totalorder %s32, 2
      %s34 = scalar_select %p33, 0, %s32
      %s35 = ssub.s32 %s22, %s34
      %s36 = ssub.s32 %s23, %s30
      %s37 = sor.u32 %s35, %s36
      %p38 = scmp.eq.s32.totalorder %s37, 0
      %s40 = sadd.s32 %s39, 1
      %s41 = scalar_select %p38, %s39, %s40
      %p44 = pneg %p38
      %p45 = scmp.eq.s32.totalorder %s15, 1
      %p46 = por %p44, %p45
      %p47 = scmp.ne.s32.totalorder %s39, %s42
      %p48 = scmp.eq.s32.totalorder %s15, 0
      %p49 = por %p47, %p48
      %p50 = scmp.ne.s32.totalorder %s39, %s42
      %p51 = scmp.eq.s32.totalorder %s20, 1
      %p52 = por %p50, %p51
      %p53 = scmp.ne.s32.totalorder %s42, %s43
      %p54 = scmp.eq.s32.totalorder %s20, 0
      %p55 = por %p53, %p54
      %p56 = scmp.ne.s32.totalorder %s42, %s43
      %p57 = scmp.eq.s32.totalorder %s21, 1
      %p58 = por %p56, %p57
      %p60 = scmp.ne.s32.totalorder %s43, %s59
      %p61 = scmp.eq.s32.totalorder %s21, 0
      %p62 = por %p60, %p61
      %s64 = sadd.s32 %s63, 1
      %p67 = scmp.eq.s32.totalorder %s15, 1
      %p68 = scmp.ne.s32.totalorder %s63, %s65
      %p69 = scmp.eq.s32.totalorder %s15, 0
      %p70 = por %p68, %p69
      %p71 = scmp.ne.s32.totalorder %s63, %s65
      %p72 = scmp.eq.s32.totalorder %s20, 1
      %p73 = por %p71, %p72
      %p74 = scmp.ne.s32.totalorder %s65, %s66
      %p75 = scmp.eq.s32.totalorder %s20, 0
      %p76 = por %p74, %p75
      %p77 = scmp.ne.s32.totalorder %s65, %s66
      %p78 = scmp.eq.s32.totalorder %s21, 1
      %p79 = por %p77, %p78
      %p81 = scmp.ne.s32.totalorder %s66, %s80
      %p82 = scmp.eq.s32.totalorder %s21, 0
      %p83 = por %p81, %p82
      %s84 = ssub.s32 %s22, %s34
      %s85 = ssub.s32 %s23, %s30
      %s86 = sor.u32 %s84, %s85
      %p87 = scmp.eq.s32.totalorder %s86, 0
      %s89 = sadd.s32 %s88, 1
      %s90 = scalar_select %p87, %s88, %s89
      %p93 = pneg %p87
      %p94 = scmp.eq.s32.totalorder %s15, 1
      %p95 = por %p93, %p94
      %p96 = scmp.ne.s32.totalorder %s88, %s91
      %p97 = scmp.eq.s32.totalorder %s15, 0
      %p98 = por %p96, %p97
      %p99 = scmp.ne.s32.totalorder %s88, %s91
      %p100 = scmp.eq.s32.totalorder %s20, 1
      %p101 = por %p99, %p100
      %p102 = scmp.ne.s32.totalorder %s91, %s92
      %p103 = scmp.eq.s32.totalorder %s20, 0
      %p104 = por %p102, %p103
      %p105 = scmp.ne.s32.totalorder %s91, %s92
      %p106 = scmp.eq.s32.totalorder %s21, 1
      %p107 = por %p105, %p106
      %p109 = scmp.ne.s32.totalorder %s92, %s108
      %p110 = scmp.eq.s32.totalorder %s21, 0
      %p111 = por %p109, %p110
      %p112 = scmp.le.s32.totalorder 1, %s15
      %p113 = scmp.lt.s32.totalorder %s15, 3
      %p114 = pnand %p112, %p113
      %p115 = pneg %p114
      // Predicated region
      $region9: #{tpu_custom_call.1} parent=5 // pred_check
        _
      $region10: #{tpu_custom_call.1} parent=5 // pred_check_branch
        %117 = sbr.rel (%p114) target = $region12
      $region11: #{tpu_custom_call.1} parent=5 // pred_region
        %s118 = ssub.s32 %s15, 1
        // Predicated region
        $region13: #{tpu_custom_call.1} parent=11 // pred_check
          %p119 = pneg %p76
        $region14: #{tpu_custom_call.1} parent=11 // pred_check_branch
          %121 = sbr.rel (%p119) target = $region16
        $region15: #{tpu_custom_call.1} parent=11 // pred_region
          %s123 = ssub.s32 16, 16
          %124 = vsyncadd [#allocation5], %s123
          %s126 = sshll.u32 %s1, 4
          %s127 = int_to_ptr.vmem [resolvable:$true] %s126
          %129 = dma.vmem_to_smem %s127, 16, [#allocation6], [#allocation5]
        $region16: #{tpu_custom_call.1} parent=11 // pred_fallthru
          _
      $region12: #{tpu_custom_call.1} parent=5 // pred_fallthru
        _
      %p130 = scmp.lt.s32.totalorder %s15, 2
      // Predicated region
      $region17: #{tpu_custom_call.1} parent=5 // pred_check
        %p131 = pneg %p130
      $region18: #{tpu_custom_call.1} parent=5 // pred_check_branch
        %133 = sbr.rel (%p131) target = $region20
      $region19: #{tpu_custom_call.1} parent=5 // pred_region
        // Predicated region
        $region21: #{tpu_custom_call.1} parent=19 // pred_check
          %p134 = pneg %p49
        $region22: #{tpu_custom_call.1} parent=19 // pred_check_branch
          %136 = sbr.rel (%p134) target = $region24
        $region23: #{tpu_custom_call.1} parent=19 // pred_region
          %s137 = sand.u32 %s39, 1
          %s138 = scalar_lea.sflag [#allocation3], %s137
          %s139 = sand.u32 %s39, 1
          %s140 = smul.addr %s139, 6
          %s141 = scalar_lea.vmem [#allocation2], %s140
          %s143 = ssub.s32 96, 96
          %144 = vsyncadd %s138, %s143
          %s145 = smul.addr %s22, 3
          %s146 = sadd.s32 %s23, %s145
          %s147 = smul.addr %s146, 32
          %s148 = scalar_lea.hbm %s0, %s147
          %s149 = sshll.u32 %s141, 4
          %s150 = int_to_ptr.vmem [resolvable:$true] %s149
          %155 = dma.hbm_to_vmem [thread:$0]  %s148, 96, %s150, %s138, 32, 32, 2
        $region24: #{tpu_custom_call.1} parent=19 // pred_fallthru
          _
      $region20: #{tpu_custom_call.1} parent=5 // pred_fallthru
        _
      %p156 = scmp.le.s32.totalorder 1, %s15
      %p157 = scmp.lt.s32.totalorder %s15, 3
      %p158 = pnand %p156, %p157
      %p159 = pneg %p158
      // Predicated region
      $region25: #{tpu_custom_call.1} parent=5 // pred_check
        _
      $region26: #{tpu_custom_call.1} parent=5 // pred_check_branch
        %161 = sbr.rel (%p158) target = $region28
      $region27: #{tpu_custom_call.1} parent=5 // pred_region
        %s162 = ssub.s32 %s15, 1
        %s163 = sand.u32 %s42, 1
        %s164 = scalar_lea.sflag [#allocation3], %s163
        %s165 = sand.u32 %s42, 1
        %s166 = smul.addr %s165, 6
        %s167 = scalar_lea.vmem [#allocation2], %s166
        // Predicated region
        $region29: #{tpu_custom_call.1} parent=27 // pred_check
          %p168 = pneg %p55
        $region30: #{tpu_custom_call.1} parent=27 // pred_check_branch
          %170 = sbr.rel (%p168) target = $region32
        $region31: #{tpu_custom_call.1} parent=27 // pred_region
          %171 = dma.done %s164, 96
        $region32: #{tpu_custom_call.1} parent=27 // pred_fallthru
          _
        // Predicated region
        $region33: #{tpu_custom_call.1} parent=27 // pred_check
          %p172 = pneg %p76
        $region34: #{tpu_custom_call.1} parent=27 // pred_check_branch
          %174 = sbr.rel (%p172) target = $region36
        $region35: #{tpu_custom_call.1} parent=27 // pred_region
          %175 = dma.done [#allocation5], 16
        $region36: #{tpu_custom_call.1} parent=27 // pred_fallthru
          _
        %176 = sfence
        %s177 = sand.u32 %s42, 1
        %s178 = scalar_lea.sflag [#allocation3], %s177
        %s179 = sand.u32 %s42, 1
        %s180 = smul.addr %s179, 6
        %s181 = scalar_lea.vmem [#allocation2], %s180
        %p182 = pneg %p55
        %p183 = pneg %p52
        %p184 = pneg %p76
        %p185 = pneg %p73
        %p186 = pneg %p104
        %p187 = pneg %p101
        %s188 = sand.u32 %s91, 1
        %s189 = scalar_lea.sflag [#allocation4], %s188
        %s190 = sand.u32 %s91, 1
        %s191 = smul.addr %s190, 6
        %s192 = scalar_lea.vmem [#allocation7], %s191
        %s193 = sld [smem:[#allocation6]]
        %v194 = vld [vmem:[%s167] sm:$0x3]
        %v195 = vstv %s193
        %v196 = vmul.f32 %v195, %v194
        %s197 = sld [smem:[#allocation6 + $0x1]]
        %s198 = scalar_lea.vmem %s167, 2 [#allocation2]
        %v199 = vld [vmem:[%s198] sm:$0x3]
        %v200 = vstv %s197
        %v201 = vmul.f32 %v200, %v199
        %v202 = vadd.f32 %v196, %v201
        %s203 = sld [smem:[#allocation6 + $0x2]]
        %s204 = scalar_lea.vmem %s167, 4 [#allocation2]
        %v205 = vld [vmem:[%s204] sm:$0x3]
        %v206 = vstv %s203
        %v207 = vmul.f32 %v206, %v205
        %v208 = vadd.f32 %v202, %v207
        %209 = vst [vmem:[%s192] sm:$0x3] %v208
        %s210 = sld [smem:[#allocation6 + $0x3]]
        %v211 = vld [vmem:[%s167] sm:$0x3]
        %v212 = vstv %s210
        %v213 = vmul.f32 %v212, %v211
        %s214 = sld [smem:[#allocation6 + $0x4]]
        %v215 = vld [vmem:[%s198] sm:$0x3]
        %v216 = vstv %s214
        %v217 = vmul.f32 %v216, %v215
        %v218 = vadd.f32 %v213, %v217
        %s219 = sld [smem:[#allocation6 + $0x5]]
        %v220 = vld [vmem:[%s204] sm:$0x3]
        %v221 = vstv %s219
        %v222 = vmul.f32 %v221, %v220
        %v223 = vadd.f32 %v218, %v222
        %s224 = scalar_lea.vmem %s192, 2 [#allocation7]
        %225 = vst [vmem:[%s224] sm:$0x3] %v223
        %s226 = sld [smem:[#allocation6 + $0x6]]
        %v227 = vld [vmem:[%s167] sm:$0x3]
        %v228 = vstv %s226
        %v229 = vmul.f32 %v228, %v227
        %s230 = sld [smem:[#allocation6 + $0x7]]
        %v231 = vld [vmem:[%s198] sm:$0x3]
        %v232 = vstv %s230
        %v233 = vmul.f32 %v232, %v231
        %v234 = vadd.f32 %v229, %v233
        %s235 = sld [smem:[#allocation6 + $0x8]]
        %v236 = vld [vmem:[%s204] sm:$0x3]
        %v237 = vstv %s235
        %v238 = vmul.f32 %v237, %v236
        %v239 = vadd.f32 %v234, %v238
        %s240 = scalar_lea.vmem %s192, 4 [#allocation7]
        %241 = vst [vmem:[%s240] sm:$0x3] %v239
        %s242 = sand.u32 %s91, 1
        %s243 = scalar_lea.sflag [#allocation4], %s242
        %s244 = sand.u32 %s91, 1
        %s245 = smul.addr %s244, 6
        %s246 = scalar_lea.vmem [#allocation7], %s245
        // Predicated region
        $region37: #{tpu_custom_call.1} parent=27 // pred_check
          %p247 = pneg %p101
        $region38: #{tpu_custom_call.1} parent=27 // pred_check_branch
          %249 = sbr.rel (%p247) target = $region40
        $region39: #{tpu_custom_call.1} parent=27 // pred_region
          %s251 = ssub.s32 96, 96
          %252 = vsyncadd %s243, %s251
          %s253 = smul.addr %s24, 3
          %s254 = sadd.s32 %s25, %s253
          %s255 = smul.addr %s254, 32
          %s256 = scalar_lea.hbm %s2, %s255
          %s257 = sshll.u32 %s246, 4
          %s258 = int_to_ptr.vmem [resolvable:$true] %s257
          %263 = dma.vmem_to_hbm [thread:$0]  %s258, 96, %s256, %s243, 32, 32, 2
        $region40: #{tpu_custom_call.1} parent=27 // pred_fallthru
          _
      $region28: #{tpu_custom_call.1} parent=5 // pred_fallthru
        _
      %p264 = scmp.le.s32.totalorder 2, %s15
      // Predicated region
      $region41: #{tpu_custom_call.1} parent=5 // pred_check
        %p265 = pneg %p264
      $region42: #{tpu_custom_call.1} parent=5 // pred_check_branch
        %267 = sbr.rel (%p265) target = $region44
      $region43: #{tpu_custom_call.1} parent=5 // pred_region
        %s268 = ssub.s32 %s15, 2
        // Predicated region
        $region45: #{tpu_custom_call.1} parent=43 // pred_check
          %p269 = pneg %p107
        $region46: #{tpu_custom_call.1} parent=43 // pred_check_branch
          %271 = sbr.rel (%p269) target = $region48
        $region47: #{tpu_custom_call.1} parent=43 // pred_region
          %s272 = sand.u32 %s92, 1
          %s273 = scalar_lea.sflag [#allocation4], %s272
          %s274 = sand.u32 %s92, 1
          %s275 = smul.addr %s274, 6
          %s276 = scalar_lea.vmem [#allocation7], %s275
          %277 = dma.done %s273, 96
        $region48: #{tpu_custom_call.1} parent=43 // pred_fallthru
          _
      $region44: #{tpu_custom_call.1} parent=5 // pred_fallthru
        _
    $region6: #{tpu_custom_call.1} parent=1 // loop_footer
      %s19 = sadd.s32 1, %s15
    $region7: #{tpu_custom_call.1} parent=1 // loop_footer_branch
      %14 = sbr.rel target = $region3
    $region8: #{tpu_custom_call.1} parent=1 // loop_exit
      _
    %278 = vsyncpa [#allocation3], 1
    %s279 = scalar_lea.sflag [#allocation3], 1
    %280 = vsyncpa %s279, 1
    %281 = vsyncpa [#allocation4], 1
    %s282 = scalar_lea.sflag [#allocation4], 1
    %283 = vsyncpa %s282, 1
    %284 = vsyncpa [#allocation5], 1
    %s285 = scalar_lea.sflag [#allocation5], 1
    %286 = vsyncpa %s285, 1

</llo_original>
